<compile_context>
chip_gen: v7x
topology: tpu7x:2x2x1
jax: 0.10.0
libtpu: 0.0.40
codegen_flags: <defaults>
</compile_context>

<pallas_src>
import functools

import jax
import jax.numpy as jnp
from jax.experimental import pallas as pl
from jax.experimental.pallas import tpu as pltpu

LANE = 128


def _round_up(x, m):
    return (x + m - 1) // m * m


def _head_matmul_kernel(x_ref, w_ref, o_ref):
    # (TILE_M, K) @ (K, COUT_PAD) on the MXU; f32 accumulation.
    o_ref[...] = jnp.dot(x_ref[...], w_ref[...],
                         preferred_element_type=jnp.float32)


def yolo_head_forward(x_nchw, weight, *, tile_m=256):
    """YoloHead.forward: 1x1 conv, stride 1, no padding, no bias.

    x_nchw: (N, Cin, H, W) float32
    weight: (Cout, Cin) float32   (PyTorch Conv2d weight[..., 0, 0])
    returns (N, Cout, H, W) float32
    """
    N, Cin, H, W = x_nchw.shape
    Cout = weight.shape[0]
    M = N * H * W

    # NCHW -> NHWC -> rows; channels land on the 128-wide lane axis.
    x_rows = jnp.transpose(x_nchw, (0, 2, 3, 1)).reshape(M, Cin)

    # Pad contraction dim, output dim and row count: lane-dense loads/stores
    # and an exact row tiling.  Zero padding does not change the result.
    k_pad = _round_up(Cin, LANE)
    cout_pad = _round_up(Cout, LANE)
    m_pad = _round_up(M, tile_m)

    x_rows = jnp.pad(x_rows, ((0, m_pad - M), (0, k_pad - Cin)))
    w_mat = jnp.pad(jnp.transpose(weight, (1, 0)),
                    ((0, k_pad - Cin), (0, cout_pad - Cout)))

    # bf16 operands (half the HBM/VMEM traffic, native MXU rate); f32 result.
    x_bf = x_rows.astype(jnp.bfloat16)
    w_bf = w_mat.astype(jnp.bfloat16)

    grid = (m_pad // tile_m,)
    cost = pl.CostEstimate(
        flops=2 * m_pad * k_pad * cout_pad,
        transcendentals=0,
        bytes_accessed=(m_pad * k_pad * 2          # activations (bf16)
                        + k_pad * cout_pad * 2     # weights (bf16, resident)
                        + m_pad * cout_pad * 4),   # f32 output
    )

    out_pad = pl.pallas_call(
        _head_matmul_kernel,
        out_shape=jax.ShapeDtypeStruct((m_pad, cout_pad), jnp.float32),
        grid_spec=pltpu.PrefetchScalarGridSpec(
            num_scalar_prefetch=0,
            grid=grid,
            in_specs=[
                # Activation row-tile: streamed + double-buffered over the grid.
                pl.BlockSpec((tile_m, k_pad), lambda i: (i, 0)),
                # Weight matrix: same block every step -> stays resident in VMEM.
                pl.BlockSpec((k_pad, cout_pad), lambda i: (0, 0)),
            ],
            out_specs=pl.BlockSpec((tile_m, cout_pad), lambda i: (i, 0)),
        ),
        compiler_params=pltpu.CompilerParams(
            dimension_semantics=("parallel",),   # shard rows across TCs on v7x
            vmem_limit_bytes=64 << 20,
        ),
        cost_estimate=cost,
    )(x_bf, w_bf)

    out = out_pad[:M, :Cout].reshape(N, H, W, Cout)
    return jnp.transpose(out, (0, 3, 1, 2))   # back to NCHW like PyTorch


if __name__ == "__main__":
    key = jax.random.PRNGKey(0)
    kx, kw = jax.random.split(key)

    # Small shapes consistent with the module: inchannel=128, outchannel=35.
    N, Cin, H, W = 2, 128, 16, 16
    Cout = 35
    x = jax.random.normal(kx, (N, Cin, H, W), jnp.float32)
    weight = 0.1 * jax.random.normal(kw, (Cout, Cin), jnp.float32)

    fwd = jax.jit(functools.partial(yolo_head_forward, tile_m=256))
    out = jax.block_until_ready(fwd(x, weight))

    assert out.shape == (N, Cout, H, W), out.shape
    assert bool(jnp.all(jnp.isfinite(out)))

    # Pure-JAX f32 reference (1x1 conv == per-pixel channel matmul).
    # Loose tolerance accounts for bf16 operand rounding (f32 accumulation).
    ref = jnp.einsum("nchw,oc->nohw", x, weight)
    max_err = float(jnp.max(jnp.abs(out - ref)))
    assert max_err < 1e-1, max_err

    print("KERNEL_OK")
</pallas_src>

<mosaic_0001>
module attributes {stable_mosaic.version = 11 : i64} {
  func.func @_head_matmul_kernel(%arg0: i32, %arg1: memref<256x128xbf16, #tpu.memory_space<vmem>>, %arg2: memref<128x128xbf16, #tpu.memory_space<vmem>>, %arg3: memref<256x128xf32, #tpu.memory_space<vmem>>) attributes {dimension_semantics = [#tpu.dimension_semantics<parallel>], iteration_bounds = array<i64: 2>, scalar_prefetch = 0 : i64, scratch_operands = 0 : i64, tpu.core_type = #tpu.core_type<tc>, window_params = [{transform_indices = @transform_0, window_bounds = array<i64: 256, 128>}, {pipeline_mode = #tpu.pipeline_mode<synchronous>, transform_indices = @transform_1, window_bounds = array<i64: 128, 128>}, {transform_indices = @transform_2, window_bounds = array<i64: 256, 128>}]} {
    %c0 = arith.constant 0 : index
    %c0_0 = arith.constant 0 : index
    %0 = vector.load %arg1[%c0, %c0_0] : memref<256x128xbf16, #tpu.memory_space<vmem>>, vector<256x128xbf16>
    %c0_1 = arith.constant 0 : index
    %c0_2 = arith.constant 0 : index
    %1 = vector.load %arg2[%c0_1, %c0_2] : memref<128x128xbf16, #tpu.memory_space<vmem>>, vector<128x128xbf16>
    %cst = arith.constant dense<0.000000e+00> : vector<256x128xf32>
    %2 = tpu.matmul %0, %1, %cst {dimension_numbers = #tpu.dot_dimension_numbers<[1], [0], [0], [1], [0, 0, 1, 1], [], []>} : vector<256x128xbf16>, vector<128x128xbf16>, vector<256x128xf32> -> vector<256x128xf32>
    %c0_3 = arith.constant 0 : index
    %c0_4 = arith.constant 0 : index
    %3 = vector.load %arg3[%c0_3, %c0_4] : memref<256x128xf32, #tpu.memory_space<vmem>>, vector<256x128xf32>
    tpu.vector_store %arg3[%c0_3, %c0_4], %2 {strides = array<i32>} : memref<256x128xf32, #tpu.memory_space<vmem>>, vector<256x128xf32>,
    return
  }
  func.func @transform_0(%arg0: i32) -> (i32, i32) {
    %c0_i32 = arith.constant 0 : i32
    %c0_i32_0 = arith.constant 0 : i32
    return %arg0, %c0_i32 : i32, i32
  }
  func.func @transform_1(%arg0: i32) -> (i32, i32) {
    %c0_i32 = arith.constant 0 : i32
    %c0_i32_0 = arith.constant 0 : i32
    %c0_i32_1 = arith.constant 0 : i32
    return %c0_i32, %c0_i32_0 : i32, i32
  }
  func.func @transform_2(%arg0: i32) -> (i32, i32) {
    %c0_i32 = arith.constant 0 : i32
    %c0_i32_0 = arith.constant 0 : i32
    return %arg0, %c0_i32 : i32, i32
  }
}

</mosaic_0001>

<llo_original>
// kernel: yolo_head_forward.1
$region0: #{yolo_head_forward.1}
  #allocation0 [shape = 'u32[]', space=smem, size = 0x4, offset = 0x4, fixed_abs, tag = 'smem constant byte address 0x4 - core index']
  #allocation1 [shape = 'u32[144,128]{1,0:T(1,128)}', space=vmem, size = 0x12000, scoped, tag = 'internal scratch']
  %s0 = inlined_call_operand.hbm [shape: bf16[512,128], index: 0, kind: input, shape index: {}]
  %s1 = inlined_call_operand.hbm [shape: bf16[128,128], index: 1, kind: input, shape index: {}]
  %s2 = inlined_call_operand.hbm [shape: f32[512,128], index: 2, kind: output, shape index: {}]
  %s3 = sld [smem:[#allocation0]]
  $region49: #{yolo_head_forward.1} parent=0
    _
  %s5 = ssub.s32 1, %s3
  %s6 = scalar_select 0, %s5, %s3
  $region1: #{yolo_head_forward.1} parent=0
    #allocation2 [shape = 'u8[131072]{0}', space=vmem, size = 0x20000, scoped, tag = 'input window, operand 0']
    #allocation3 [shape = 's32[2]{0}', space=sflag, size = 0x8, scoped, tag = 'scoped memory for yolo_head_forward.1']
    #allocation4 [shape = 's32[2]{0}', space=sflag, size = 0x8, scoped, tag = 'scoped memory for yolo_head_forward.1']
    #allocation5 [shape = 'u8[32768]{0}', space=vmem, size = 0x8000, scoped, tag = 'input window, operand 1, single buffered']
    #allocation6 [shape = 's32[1]{0}', space=sflag, size = 0x4, scoped, tag = 'scoped memory for yolo_head_forward.1']
    #allocation7 [shape = 'u8[262144]{0}', space=vmem, size = 0x40000, scoped, tag = 'output window, operand 0']
    %7 = vsyncpa [#allocation3], 0
    %s8 = scalar_lea.sflag [#allocation3], 1
    %9 = vsyncpa %s8, 0
    %10 = vsyncpa [#allocation6], 0
    %11 = vsyncpa [#allocation4], 0
    %s12 = scalar_lea.sflag [#allocation4], 1
    %13 = vsyncpa %s12, 0
    loop: start=0, step=1, limit=4
    $region2: #{yolo_head_forward.1} parent=1 // loop_pre_header
      _
    $region3: #{yolo_head_forward.1} parent=1 // loop_header
      %s15 = sphi 0, %s19
      %p16 = scmp.ge.s32.totalorder %s15, 4
      %s25 = sphi 0, %s27
      %s28 = sphi 0, %s25
      %s29 = sphi 0, %s28
      %s45 = sphi 0, %s29
      %s49 = sphi 0, %s49
      %s51 = sphi 0, %s49
      %s52 = sphi 0, %s51
      %s66 = sphi 0, %s52
      %s72 = sphi 0, %s74
      %s75 = sphi 0, %s72
      %s76 = sphi 0, %s75
      %s92 = sphi 0, %s76
    $region4: #{yolo_head_forward.1} parent=1 // loop_header_branch
      %18 = sbr.rel (%p16) target = $region8
    $region5: #{yolo_head_forward.1} parent=1 // loop_body
      %s20 = ssub.s32 %s15, 1
      %s21 = ssub.s32 %s15, 2
      %s22 = sadd.s32 %s15, 1
      %s23 = ssub.s32 %s15, %s22
      %p24 = scmp.eq.s32.totalorder %s23, 0
      %s26 = sadd.s32 %s25, 1
      %s27 = scalar_select %p24, %s25, %s26
      %p30 = pneg %p24
      %p31 = scmp.eq.s32.totalorder %s15, 1
      %p32 = por %p30, %p31
      %p33 = scmp.ne.s32.totalorder %s25, %s28
      %p34 = scmp.eq.s32.totalorder %s15, 0
      %p35 = por %p33, %p34
      %p36 = scmp.ne.s32.totalorder %s25, %s28
      %p37 = scmp.eq.s32.totalorder %s20, 1
      %p38 = por %p36, %p37
      %p39 = scmp.ne.s32.totalorder %s28, %s29
      %p40 = scmp.eq.s32.totalorder %s20, 0
      %p41 = por %p39, %p40
      %p42 = scmp.ne.s32.totalorder %s28, %s29
      %p43 = scmp.eq.s32.totalorder %s21, 1
      %p44 = por %p42, %p43
      %p46 = scmp.ne.s32.totalorder %s29, %s45
      %p47 = scmp.eq.s32.totalorder %s21, 0
      %p48 = por %p46, %p47
      %s50 = sadd.s32 %s49, 1
      %p53 = scmp.eq.s32.totalorder %s15, 1
      %p54 = scmp.ne.s32.totalorder %s49, %s51
      %p55 = scmp.eq.s32.totalorder %s15, 0
      %p56 = por %p54, %p55
      %p57 = scmp.ne.s32.totalorder %s49, %s51
      %p58 = scmp.eq.s32.totalorder %s20, 1
      %p59 = por %p57, %p58
      %p60 = scmp.ne.s32.totalorder %s51, %s52
      %p61 = scmp.eq.s32.totalorder %s20, 0
      %p62 = por %p60, %p61
      %p63 = scmp.ne.s32.totalorder %s51, %s52
      %p64 = scmp.eq.s32.totalorder %s21, 1
      %p65 = por %p63, %p64
      %p67 = scmp.ne.s32.totalorder %s52, %s66
      %p68 = scmp.eq.s32.totalorder %s21, 0
      %p69 = por %p67, %p68
      %s70 = ssub.s32 %s15, %s22
      %p71 = scmp.eq.s32.totalorder %s70, 0
      %s73 = sadd.s32 %s72, 1
      %s74 = scalar_select %p71, %s72, %s73
      %p77 = pneg %p71
      %p78 = scmp.eq.s32.totalorder %s15, 1
      %p79 = por %p77, %p78
      %p80 = scmp.ne.s32.totalorder %s72, %s75
      %p81 = scmp.eq.s32.totalorder %s15, 0
      %p82 = por %p80, %p81
      %p83 = scmp.ne.s32.totalorder %s72, %s75
      %p84 = scmp.eq.s32.totalorder %s20, 1
      %p85 = por %p83, %p84
      %p86 = scmp.ne.s32.totalorder %s75, %s76
      %p87 = scmp.eq.s32.totalorder %s20, 0
      %p88 = por %p86, %p87
      %p89 = scmp.ne.s32.totalorder %s75, %s76
      %p90 = scmp.eq.s32.totalorder %s21, 1
      %p91 = por %p89, %p90
      %p93 = scmp.ne.s32.totalorder %s76, %s92
      %p94 = scmp.eq.s32.totalorder %s21, 0
      %p95 = por %p93, %p94
      %p96 = scmp.le.s32.totalorder 1, %s15
      %p97 = scmp.lt.s32.totalorder %s15, 3
      %p98 = pnand %p96, %p97
      %p99 = pneg %p98
      // Predicated region
      $region9: #{yolo_head_forward.1} parent=5 // pred_check
        _
      $region10: #{yolo_head_forward.1} parent=5 // pred_check_branch
        %101 = sbr.rel (%p98) target = $region12
      $region11: #{yolo_head_forward.1} parent=5 // pred_region
        %s102 = ssub.s32 %s15, 1
        // Predicated region
        $region13: #{yolo_head_forward.1} parent=11 // pred_check
          %p103 = pneg %p62
        $region14: #{yolo_head_forward.1} parent=11 // pred_check_branch
          %105 = sbr.rel (%p103) target = $region16
        $region15: #{yolo_head_forward.1} parent=11 // pred_region
          %s107 = ssub.s32 1024, 1024
          %108 = vsyncadd [#allocation6], %s107
          %s109 = sshll.u32 [#allocation5], 4
          %s110 = int_to_ptr.vmem [resolvable:$true] %s109
          %115 = dma.hbm_to_vmem [thread:$0]  %s1, 1024, %s110, [#allocation6], 64, 64, 4
        $region16: #{yolo_head_forward.1} parent=11 // pred_fallthru
          _
      $region12: #{yolo_head_forward.1} parent=5 // pred_fallthru
        _
      %p116 = scmp.lt.s32.totalorder %s15, 2
      // Predicated region
      $region17: #{yolo_head_forward.1} parent=5 // pred_check
        %p117 = pneg %p116
      $region18: #{yolo_head_forward.1} parent=5 // pred_check_branch
        %119 = sbr.rel (%p117) target = $region20
      $region19: #{yolo_head_forward.1} parent=5 // pred_region
        // Predicated region
        $region21: #{yolo_head_forward.1} parent=19 // pred_check
          %p120 = pneg %p35
        $region22: #{yolo_head_forward.1} parent=19 // pred_check_branch
          %122 = sbr.rel (%p120) target = $region24
        $region23: #{yolo_head_forward.1} parent=19 // pred_region
          %s123 = sand.u32 %s25, 1
          %s124 = scalar_lea.sflag [#allocation3], %s123
          %s125 = sand.u32 %s25, 1
          %s126 = smul.addr %s125, 128
          %s127 = scalar_lea.vmem [#allocation2], %s126
          %s128 = smul.u32 32, %s15
          %s130 = ssub.s32 2048, 2048
          %131 = vsyncadd %s124, %s130
          %s132 = smul.addr %s128, 64
          %s133 = scalar_lea.hbm %s0, %s132
          %s134 = sshll.u32 %s127, 4
          %s135 = int_to_ptr.vmem [resolvable:$true] %s134
          %140 = dma.hbm_to_vmem [thread:$0]  %s133, 2048, %s135, %s124, 64, 64, 4
        $region24: #{yolo_head_forward.1} parent=19 // pred_fallthru
          _
      $region20: #{yolo_head_forward.1} parent=5 // pred_fallthru
        _
      %p141 = scmp.le.s32.totalorder 1, %s15
      %p142 = scmp.lt.s32.totalorder %s15, 3
      %p143 = pnand %p141, %p142
      %p144 = pneg %p143
      // Predicated region
      $region25: #{yolo_head_forward.1} parent=5 // pred_check
        _
      $region26: #{yolo_head_forward.1} parent=5 // pred_check_branch
        %146 = sbr.rel (%p143) target = $region28
      $region27: #{yolo_head_forward.1} parent=5 // pred_region
        %s147 = ssub.s32 %s15, 1
        %s148 = sand.u32 %s28, 1
        %s149 = scalar_lea.sflag [#allocation3], %s148
        %s150 = sand.u32 %s28, 1
        %s151 = smul.addr %s150, 128
        %s152 = scalar_lea.vmem [#allocation2], %s151
        // Predicated region
        $region29: #{yolo_head_forward.1} parent=27 // pred_check
          %p153 = pneg %p41
        $region30: #{yolo_head_forward.1} parent=27 // pred_check_branch
          %155 = sbr.rel (%p153) target = $region32
        $region31: #{yolo_head_forward.1} parent=27 // pred_region
          %156 = dma.done %s149, 2048
        $region32: #{yolo_head_forward.1} parent=27 // pred_fallthru
          _
        // Predicated region
        $region33: #{yolo_head_forward.1} parent=27 // pred_check
          %p157 = pneg %p62
        $region34: #{yolo_head_forward.1} parent=27 // pred_check_branch
          %159 = sbr.rel (%p157) target = $region36
        $region35: #{yolo_head_forward.1} parent=27 // pred_region
          %160 = dma.done [#allocation6], 1024
        $region36: #{yolo_head_forward.1} parent=27 // pred_fallthru
          _
        %s161 = sand.u32 %s28, 1
        %s162 = scalar_lea.sflag [#allocation3], %s161
        %s163 = sand.u32 %s28, 1
        %s164 = smul.addr %s163, 128
        %s165 = scalar_lea.vmem [#allocation2], %s164
        %p166 = pneg %p41
        %p167 = pneg %p38
        %p168 = pneg %p62
        %p169 = pneg %p59
        %p170 = pneg %p88
        %p171 = pneg %p85
        %s172 = sand.u32 %s75, 1
        %s173 = scalar_lea.sflag [#allocation4], %s172
        %s174 = sand.u32 %s75, 1
        %s175 = smul.addr %s174, 256
        %s176 = scalar_lea.vmem [#allocation7], %s175
        %s177 = smul.u32 32, %s20
        %s178 = smul.u32 32, %s20
        %v180 = vld [vmem:[%s152] sm:$0xf]
        %v181 = vld [vmem:[%s152 + $0x4] sm:$0xf]
        %v182 = vld [vmem:[%s152 + $0x8] sm:$0xf]
        %v183 = vld [vmem:[%s152 + $0xc] sm:$0xf]
        %v184 = vld [vmem:[%s152 + $0x10] sm:$0xf]
        %v185 = vld [vmem:[%s152 + $0x14] sm:$0xf]
        %v186 = vld [vmem:[%s152 + $0x18] sm:$0xf]
        %v187 = vld [vmem:[%s152 + $0x1c] sm:$0xf]
        %v188 = vld [vmem:[%s152 + $0x20] sm:$0xf]
        %v189 = vld [vmem:[%s152 + $0x24] sm:$0xf]
        %v190 = vld [vmem:[%s152 + $0x28] sm:$0xf]
        %v191 = vld [vmem:[%s152 + $0x2c] sm:$0xf]
        %v192 = vld [vmem:[%s152 + $0x30] sm:$0xf]
        %v193 = vld [vmem:[%s152 + $0x34] sm:$0xf]
        %v194 = vld [vmem:[%s152 + $0x38] sm:$0xf]
        %v195 = vld [vmem:[%s152 + $0x3c] sm:$0xf]
        %v196 = vld [vmem:[%s152 + $0x40] sm:$0xf]
        %v197 = vld [vmem:[%s152 + $0x44] sm:$0xf]
        %v198 = vld [vmem:[%s152 + $0x48] sm:$0xf]
        %v199 = vld [vmem:[%s152 + $0x4c] sm:$0xf]
        %v200 = vld [vmem:[%s152 + $0x50] sm:$0xf]
        %v201 = vld [vmem:[%s152 + $0x54] sm:$0xf]
        %v202 = vld [vmem:[%s152 + $0x58] sm:$0xf]
        %v203 = vld [vmem:[%s152 + $0x5c] sm:$0xf]
        %v204 = vld [vmem:[%s152 + $0x60] sm:$0xf]
        %v205 = vld [vmem:[%s152 + $0x64] sm:$0xf]
        %v206 = vld [vmem:[%s152 + $0x68] sm:$0xf]
        %v207 = vld [vmem:[%s152 + $0x6c] sm:$0xf]
        %v208 = vld [vmem:[%s152 + $0x70] sm:$0xf]
        %v209 = vld [vmem:[%s152 + $0x74] sm:$0xf]
        %v210 = vld [vmem:[%s152 + $0x78] sm:$0xf]
        %v211 = vld [vmem:[%s152 + $0x7c] sm:$0xf]
        %v212 = vld [vmem:[#allocation5] sm:$0xf]
        %v213 = vld [vmem:[#allocation5 + $0x4] sm:$0xf]
        %v214 = vld [vmem:[#allocation5 + $0x8] sm:$0xf]
        %v215 = vld [vmem:[#allocation5 + $0xc] sm:$0xf]
        %v216 = vld [vmem:[#allocation5 + $0x10] sm:$0xf]
        %v217 = vld [vmem:[#allocation5 + $0x14] sm:$0xf]
        %v218 = vld [vmem:[#allocation5 + $0x18] sm:$0xf]
        %v219 = vld [vmem:[#allocation5 + $0x1c] sm:$0xf]
        %v220 = vld [vmem:[#allocation5 + $0x20] sm:$0xf]
        %v221 = vld [vmem:[#allocation5 + $0x24] sm:$0xf]
        %v222 = vld [vmem:[#allocation5 + $0x28] sm:$0xf]
        %v223 = vld [vmem:[#allocation5 + $0x2c] sm:$0xf]
        %v224 = vld [vmem:[#allocation5 + $0x30] sm:$0xf]
        %v225 = vld [vmem:[#allocation5 + $0x34] sm:$0xf]
        %v226 = vld [vmem:[#allocation5 + $0x38] sm:$0xf]
        %v227 = vld [vmem:[#allocation5 + $0x3c] sm:$0xf]
        %v260 = vunpack.c.l.b16 %v180
        %v261 = vunpack.c.l.b16 %v181
        %v262 = vunpack.c.l.b16 %v182
        %v263 = vunpack.c.l.b16 %v183
        %v264 = vunpack.c.l.b16 %v184
        %v265 = vunpack.c.l.b16 %v185
        %v266 = vunpack.c.l.b16 %v186
        %v267 = vunpack.c.l.b16 %v187
        %v268 = vunpack.c.l.b16 %v188
        %v269 = vunpack.c.l.b16 %v189
        %v270 = vunpack.c.l.b16 %v190
        %v271 = vunpack.c.l.b16 %v191
        %v272 = vunpack.c.l.b16 %v192
        %v273 = vunpack.c.l.b16 %v193
        %v274 = vunpack.c.l.b16 %v194
        %v275 = vunpack.c.l.b16 %v195
        %v276 = vunpack.c.l.b16 %v196
        %v277 = vunpack.c.l.b16 %v197
        %v278 = vunpack.c.l.b16 %v198
        %v279 = vunpack.c.l.b16 %v199
        %v280 = vunpack.c.l.b16 %v200
        %v281 = vunpack.c.l.b16 %v201
        %v282 = vunpack.c.l.b16 %v202
        %v283 = vunpack.c.l.b16 %v203
        %v284 = vunpack.c.l.b16 %v204
        %v285 = vunpack.c.l.b16 %v205
        %v286 = vunpack.c.l.b16 %v206
        %v287 = vunpack.c.l.b16 %v207
        %v288 = vunpack.c.l.b16 %v208
        %v289 = vunpack.c.l.b16 %v209
        %v290 = vunpack.c.l.b16 %v210
        %v291 = vunpack.c.l.b16 %v211
        %v292 = vpack.c.b16 %v261, %v260
        %v293 = vpack.c.b16 %v263, %v262
        %v294 = vpack.c.b16 %v265, %v264
        %v295 = vpack.c.b16 %v267, %v266
        %v296 = vpack.c.b16 %v269, %v268
        %v297 = vpack.c.b16 %v271, %v270
        %v298 = vpack.c.b16 %v273, %v272
        %v299 = vpack.c.b16 %v275, %v274
        %v300 = vpack.c.b16 %v277, %v276
        %v301 = vpack.c.b16 %v279, %v278
        %v302 = vpack.c.b16 %v281, %v280
        %v303 = vpack.c.b16 %v283, %v282
        %v304 = vpack.c.b16 %v285, %v284
        %v305 = vpack.c.b16 %v287, %v286
        %v306 = vpack.c.b16 %v289, %v288
        %v307 = vpack.c.b16 %v291, %v290
        %v340 = vunpack.c.l.b16 %v212
        %v341 = vunpack.c.l.b16 %v213
        %v342 = vunpack.c.l.b16 %v214
        %v343 = vunpack.c.l.b16 %v215
        %v344 = vunpack.c.l.b16 %v216
        %v345 = vunpack.c.l.b16 %v217
        %v346 = vunpack.c.l.b16 %v218
        %v347 = vunpack.c.l.b16 %v219
        %v348 = vunpack.c.l.b16 %v220
        %v349 = vunpack.c.l.b16 %v221
        %v350 = vunpack.c.l.b16 %v222
        %v351 = vunpack.c.l.b16 %v223
        %v352 = vunpack.c.l.b16 %v224
        %v353 = vunpack.c.l.b16 %v225
        %v354 = vunpack.c.l.b16 %v226
        %v355 = vunpack.c.l.b16 %v227
        %v356 = vpack.c.b16 %v341, %v340
        %v357 = vpack.c.b16 %v343, %v342
        %v358 = vpack.c.b16 %v345, %v344
        %v359 = vpack.c.b16 %v347, %v346
        %v360 = vpack.c.b16 %v349, %v348
        %v361 = vpack.c.b16 %v351, %v350
        %v362 = vpack.c.b16 %v353, %v352
        %v363 = vpack.c.b16 %v355, %v354
        %372 = vmatprep.subr.bf16.mxu0 0
        %373 = vmatpush1.bf16.msra.mxu0 %v356
        %374 = vmatprep.subr.bf16.mxu0 0
        %375 = vmatpush1.bf16.msra.mxu0 %v357
        %376 = vmatprep.subr.bf16.mxu0 0
        %377 = vmatpush1.bf16.msra.mxu0 %v358
        %378 = vmatprep.subr.bf16.mxu0 0
        %379 = vmatpush1.bf16.msra.mxu0 %v359
        %380 = vmatprep.subr.bf16.mxu0 0
        %381 = vmatpush1.bf16.msra.mxu0 %v360
        %382 = vmatprep.subr.bf16.mxu0 0
        %383 = vmatpush1.bf16.msra.mxu0 %v361
        %384 = vmatprep.subr.bf16.mxu0 0
        %385 = vmatpush1.bf16.msra.mxu0 %v362
        %386 = vmatprep.subr.bf16.mxu0 0
        %387 = vmatpush1.bf16.msra.mxu0 %v363
        %388 = vmatprep.subr.bf16.mxu0 0
        %389 = vmatpush1.bf16.msra.mxu0 0
        %390 = vmatprep.subr.bf16.mxu0 0
        %391 = vmatpush1.bf16.msra.mxu0 0
        %392 = vmatprep.subr.bf16.mxu0 0
        %393 = vmatpush1.bf16.msra.mxu0 0
        %394 = vmatprep.subr.bf16.mxu0 0
        %395 = vmatpush1.bf16.msra.mxu0 0
        %396 = vmatprep.subr.bf16.mxu0 0
        %397 = vmatpush1.bf16.msra.mxu0 0
        %398 = vmatprep.subr.bf16.mxu0 0
        %399 = vmatpush1.bf16.msra.mxu0 0
        %400 = vmatprep.subr.bf16.mxu0 0
        %401 = vmatpush1.bf16.msra.mxu0 0
        %402 = vmatprep.subr.bf16.mxu0 0
        %403 = vmatpush1.bf16.msra.mxu0 0
        %404 = vmatprep.mubr.bf16.mxu0 0
        %405 = vmatmul.mubr.bf16.gmra.mrb[0].mxu0 %v292
        %v406 = vpop.f32.mrb[0].mxu0
        %v407 = vadd.f32 0.0, %v406
        %v408 = vpop.f32.mrb[0].mxu0
        %v409 = vpop.f32.mrb[0].mxu0
        %v410 = vadd.f32 0.0, %v409
        %v411 = vpop.f32.mrb[0].mxu0
        %412 = vmatprep.mubr.bf16.mxu0 0
        %413 = vmatmul.mubr.bf16.gmra.mrb[0].mxu0 %v293
        %v414 = vpop.f32.mrb[0].mxu0
        %v415 = vadd.f32 0.0, %v414
        %v416 = vpop.f32.mrb[0].mxu0
        %v417 = vpop.f32.mrb[0].mxu0
        %v418 = vadd.f32 0.0, %v417
        %v419 = vpop.f32.mrb[0].mxu0
        %420 = vmatprep.mubr.bf16.mxu0 0
        %421 = vmatmul.mubr.bf16.gmra.mrb[0].mxu0 %v294
        %v422 = vpop.f32.mrb[0].mxu0
        %v423 = vadd.f32 0.0, %v422
        %v424 = vpop.f32.mrb[0].mxu0
        %v425 = vpop.f32.mrb[0].mxu0
        %v426 = vadd.f32 0.0, %v425
        %v427 = vpop.f32.mrb[0].mxu0
        %428 = vmatprep.mubr.bf16.mxu0 0
        %429 = vmatmul.mubr.bf16.gmra.mrb[0].mxu0 %v295
        %v430 = vpop.f32.mrb[0].mxu0
        %v431 = vadd.f32 0.0, %v430
        %v432 = vpop.f32.mrb[0].mxu0
        %v433 = vpop.f32.mrb[0].mxu0
        %v434 = vadd.f32 0.0, %v433
        %v435 = vpop.f32.mrb[0].mxu0
        %436 = vmatprep.mubr.bf16.mxu0 0
        %437 = vmatmul.mubr.bf16.gmra.mrb[0].mxu0 %v296
        %v438 = vpop.f32.mrb[0].mxu0
        %v439 = vadd.f32 0.0, %v438
        %v440 = vpop.f32.mrb[0].mxu0
        %v441 = vpop.f32.mrb[0].mxu0
        %v442 = vadd.f32 0.0, %v441
        %v443 = vpop.f32.mrb[0].mxu0
        %444 = vmatprep.mubr.bf16.mxu0 0
        %445 = vmatmul.mubr.bf16.gmra.mrb[0].mxu0 %v297
        %v446 = vpop.f32.mrb[0].mxu0
        %v447 = vadd.f32 0.0, %v446
        %v448 = vpop.f32.mrb[0].mxu0
        %v449 = vpop.f32.mrb[0].mxu0
        %v450 = vadd.f32 0.0, %v449
        %v451 = vpop.f32.mrb[0].mxu0
        %452 = vmatprep.mubr.bf16.mxu0 0
        %453 = vmatmul.mubr.bf16.gmra.mrb[0].mxu0 %v298
        %v454 = vpop.f32.mrb[0].mxu0
        %v455 = vadd.f32 0.0, %v454
        %v456 = vpop.f32.mrb[0].mxu0
        %v457 = vpop.f32.mrb[0].mxu0
        %v458 = vadd.f32 0.0, %v457
        %v459 = vpop.f32.mrb[0].mxu0
        %460 = vmatprep.mubr.bf16.mxu0 0
        %461 = vmatmul.mubr.bf16.gmra.mrb[0].mxu0 %v299
        %v462 = vpop.f32.mrb[0].mxu0
        %v463 = vadd.f32 0.0, %v462
        %v464 = vpop.f32.mrb[0].mxu0
        %v465 = vpop.f32.mrb[0].mxu0
        %v466 = vadd.f32 0.0, %v465
        %v467 = vpop.f32.mrb[0].mxu0
        %468 = vmatprep.mubr.bf16.mxu0 0
        %469 = vmatmul.mubr.bf16.gmra.mrb[0].mxu0 %v300
        %v470 = vpop.f32.mrb[0].mxu0
        %v471 = vadd.f32 0.0, %v470
        %v472 = vpop.f32.mrb[0].mxu0
        %v473 = vpop.f32.mrb[0].mxu0
        %v474 = vadd.f32 0.0, %v473
        %v475 = vpop.f32.mrb[0].mxu0
        %476 = vmatprep.mubr.bf16.mxu0 0
        %477 = vmatmul.mubr.bf16.gmra.mrb[0].mxu0 %v301
        %v478 = vpop.f32.mrb[0].mxu0
        %v479 = vadd.f32 0.0, %v478
        %v480 = vpop.f32.mrb[0].mxu0
        %v481 = vpop.f32.mrb[0].mxu0
        %v482 = vadd.f32 0.0, %v481
        %v483 = vpop.f32.mrb[0].mxu0
        %484 = vmatprep.mubr.bf16.mxu0 0
        %485 = vmatmul.mubr.bf16.gmra.mrb[0].mxu0 %v302
        %v486 = vpop.f32.mrb[0].mxu0
        %v487 = vadd.f32 0.0, %v486
        %v488 = vpop.f32.mrb[0].mxu0
        %v489 = vpop.f32.mrb[0].mxu0
        %v490 = vadd.f32 0.0, %v489
        %v491 = vpop.f32.mrb[0].mxu0
        %492 = vmatprep.mubr.bf16.mxu0 0
        %493 = vmatmul.mubr.bf16.gmra.mrb[0].mxu0 %v303
        %v494 = vpop.f32.mrb[0].mxu0
        %v495 = vadd.f32 0.0, %v494
        %v496 = vpop.f32.mrb[0].mxu0
        %v497 = vpop.f32.mrb[0].mxu0
        %v498 = vadd.f32 0.0, %v497
        %v499 = vpop.f32.mrb[0].mxu0
        %500 = vmatprep.mubr.bf16.mxu0 0
        %501 = vmatmul.mubr.bf16.gmra.mrb[0].mxu0 %v304
        %v502 = vpop.f32.mrb[0].mxu0
        %v503 = vadd.f32 0.0, %v502
        %v504 = vpop.f32.mrb[0].mxu0
        %v505 = vpop.f32.mrb[0].mxu0
        %v506 = vadd.f32 0.0, %v505
        %v507 = vpop.f32.mrb[0].mxu0
        %508 = vmatprep.mubr.bf16.mxu0 0
        %509 = vmatmul.mubr.bf16.gmra.mrb[0].mxu0 %v305
        %v510 = vpop.f32.mrb[0].mxu0
        %v511 = vadd.f32 0.0, %v510
        %v512 = vpop.f32.mrb[0].mxu0
        %v513 = vpop.f32.mrb[0].mxu0
        %v514 = vadd.f32 0.0, %v513
        %v515 = vpop.f32.mrb[0].mxu0
        %516 = vmatprep.mubr.bf16.mxu0 0
        %517 = vmatmul.mubr.bf16.gmra.mrb[0].mxu0 %v306
        %v518 = vpop.f32.mrb[0].mxu0
        %v519 = vadd.f32 0.0, %v518
        %v520 = vpop.f32.mrb[0].mxu0
        %v521 = vpop.f32.mrb[0].mxu0
        %v522 = vadd.f32 0.0, %v521
        %v523 = vpop.f32.mrb[0].mxu0
        %524 = vmatprep.mubr.bf16.mxu0 0
        %525 = vmatmul.mubr.bf16.gmra.mrb[0].mxu0 %v307
        %v526 = vpop.f32.mrb[0].mxu0
        %v527 = vadd.f32 0.0, %v526
        %v528 = vpop.f32.mrb[0].mxu0
        %v529 = vpop.f32.mrb[0].mxu0
        %v530 = vadd.f32 0.0, %v529
        %v531 = vpop.f32.mrb[0].mxu0
        %532 = vdwg.mxu0
        %533 = vst [vmem:[%s176] sm:$0xff] %v407
        %534 = vst [vmem:[%s176 + $0x8] sm:$0xff] %v410
        %535 = vst [vmem:[%s176 + $0x10] sm:$0xff] %v415
        %536 = vst [vmem:[%s176 + $0x18] sm:$0xff] %v418
        %537 = vst [vmem:[%s176 + $0x20] sm:$0xff] %v423
        %538 = vst [vmem:[%s176 + $0x28] sm:$0xff] %v426
        %539 = vst [vmem:[%s176 + $0x30] sm:$0xff] %v431
        %540 = vst [vmem:[%s176 + $0x38] sm:$0xff] %v434
        %541 = vst [vmem:[%s176 + $0x40] sm:$0xff] %v439
        %542 = vst [vmem:[%s176 + $0x48] sm:$0xff] %v442
        %543 = vst [vmem:[%s176 + $0x50] sm:$0xff] %v447
        %544 = vst [vmem:[%s176 + $0x58] sm:$0xff] %v450
        %545 = vst [vmem:[%s176 + $0x60] sm:$0xff] %v455
        %546 = vst [vmem:[%s176 + $0x68] sm:$0xff] %v458
        %547 = vst [vmem:[%s176 + $0x70] sm:$0xff] %v463
        %548 = vst [vmem:[%s176 + $0x78] sm:$0xff] %v466
        %549 = vst [vmem:[%s176 + $0x80] sm:$0xff] %v471
        %550 = vst [vmem:[%s176 + $0x88] sm:$0xff] %v474
        %551 = vst [vmem:[%s176 + $0x90] sm:$0xff] %v479
        %552 = vst [vmem:[%s176 + $0x98] sm:$0xff] %v482
        %553 = vst [vmem:[%s176 + $0xa0] sm:$0xff] %v487
        %554 = vst [vmem:[%s176 + $0xa8] sm:$0xff] %v490
        %555 = vst [vmem:[%s176 + $0xb0] sm:$0xff] %v495
        %556 = vst [vmem:[%s176 + $0xb8] sm:$0xff] %v498
        %557 = vst [vmem:[%s176 + $0xc0] sm:$0xff] %v503
        %558 = vst [vmem:[%s176 + $0xc8] sm:$0xff] %v506
        %559 = vst [vmem:[%s176 + $0xd0] sm:$0xff] %v511
        %560 = vst [vmem:[%s176 + $0xd8] sm:$0xff] %v514
        %561 = vst [vmem:[%s176 + $0xe0] sm:$0xff] %v519
        %562 = vst [vmem:[%s176 + $0xe8] sm:$0xff] %v522
        %563 = vst [vmem:[%s176 + $0xf0] sm:$0xff] %v527
        %564 = vst [vmem:[%s176 + $0xf8] sm:$0xff] %v530
        %s565 = sand.u32 %s75, 1
        %s566 = scalar_lea.sflag [#allocation4], %s565
        %s567 = sand.u32 %s75, 1
        %s568 = smul.addr %s567, 256
        %s569 = scalar_lea.vmem [#allocation7], %s568
        // Predicated region
        $region37: #{yolo_head_forward.1} parent=27 // pred_check
          %p570 = pneg %p85
        $region38: #{yolo_head_forward.1} parent=27 // pred_check_branch
          %572 = sbr.rel (%p570) target = $region40
        $region39: #{yolo_head_forward.1} parent=27 // pred_region
          %s573 = smul.u32 32, %s20
          %s575 = ssub.s32 4096, 4096
          %576 = vsyncadd %s566, %s575
          %s577 = smul.addr %s573, 128
          %s578 = scalar_lea.hbm %s2, %s577
          %s579 = sshll.u32 %s569, 4
          %s580 = int_to_ptr.vmem [resolvable:$true] %s579
          %585 = dma.vmem_to_hbm [thread:$0]  %s580, 4096, %s578, %s566, 128, 128, 8
        $region40: #{yolo_head_forward.1} parent=27 // pred_fallthru
          _
      $region28: #{yolo_head_forward.1} parent=5 // pred_fallthru
        _
      %p586 = scmp.le.s32.totalorder 2, %s15
      // Predicated region
      $region41: #{yolo_head_forward.1} parent=5 // pred_check
        %p587 = pneg %p586
      $region42: #{yolo_head_forward.1} parent=5 // pred_check_branch
        %589 = sbr.rel (%p587) target = $region44
      $region43: #{yolo_head_forward.1} parent=5 // pred_region
        %s590 = ssub.s32 %s15, 2
        // Predicated region
        $region45: #{yolo_head_forward.1} parent=43 // pred_check
          %p591 = pneg %p91
        $region46: #{yolo_head_forward.1} parent=43 // pred_check_branch
          %593 = sbr.rel (%p591) target = $region48
        $region47: #{yolo_head_forward.1} parent=43 // pred_region
          %s594 = sand.u32 %s76, 1
          %s595 = scalar_lea.sflag [#allocation4], %s594
          %s596 = sand.u32 %s76, 1
          %s597 = smul.addr %s596, 256
          %s598 = scalar_lea.vmem [#allocation7], %s597
          %599 = dma.done %s595, 4096
        $region48: #{yolo_head_forward.1} parent=43 // pred_fallthru
          _
      $region44: #{yolo_head_forward.1} parent=5 // pred_fallthru
        _
    $region6: #{yolo_head_forward.1} parent=1 // loop_footer
      %s19 = sadd.s32 1, %s15
    $region7: #{yolo_head_forward.1} parent=1 // loop_footer_branch
      %14 = sbr.rel target = $region3
    $region8: #{yolo_head_forward.1} parent=1 // loop_exit
      _
    %600 = vsyncpa [#allocation3], 1
    %s601 = scalar_lea.sflag [#allocation3], 1
    %602 = vsyncpa %s601, 1
    %603 = vsyncpa [#allocation6], 1
    %604 = vsyncpa [#allocation4], 1
    %s605 = scalar_lea.sflag [#allocation4], 1
    %606 = vsyncpa %s605, 1

</llo_original>
